<compile_context>
chip_gen: v5e
topology: v5e:2x2
jax: 0.10.0
libtpu: 0.0.40
codegen_flags: <defaults>
</compile_context>

<pallas_src>
import math

import jax
import jax.numpy as jnp
from jax import lax
from jax.experimental import pallas as pl
from jax.experimental.pallas import tpu as pltpu


# ---------------------------------------------------------------------------
# Tiling helpers
# ---------------------------------------------------------------------------
def _pick_tile(T, bytes_per_step, budget_bytes):
    """Largest tile that is == T or a multiple of 8 dividing T and keeps
    tile * bytes_per_step within `budget_bytes`.  Falls back to the smallest
    legal tile (the VMEM limit is then raised from the actual block sizes)."""
    cands = [T] + [t for t in range(T - (T % 8), 7, -8) if t != T and T % t == 0]
    for tt in cands:
        if tt * bytes_per_step <= budget_bytes:
            return tt
    return cands[-1]


def _vmem_limit(base, *block_bytes):
    """Scoped-VMEM limit covering double-buffered blocks + slack."""
    need = 2 * sum(int(b) for b in block_bytes) + (4 << 20)
    return int(min(max(base, need), 128 * 1024 * 1024))


# ---------------------------------------------------------------------------
# Kernel 1: per-(frame) energy statistics  ->  (B, T, 2C) feature buffer
# ---------------------------------------------------------------------------
def energy_kernel(x_ref, zt_ref):
    # x_ref : (1, C, tt, F)
    # zt_ref: (1, tt, 2C)   [:, :, :C] = mean(x^2, F), [:, :, C:] = max(x^2, F)
    x = x_ref[0]                                   # (C, tt, F)
    x2 = x * x
    C = x2.shape[0]
    zt_ref[0, :, :C] = jnp.mean(x2, axis=-1).T     # (tt, C)
    zt_ref[0, :, C:] = jnp.max(x2, axis=-1).T      # (tt, C)


# ---------------------------------------------------------------------------
# Kernel 2: batched GRU recurrence + att_fc + sigmoid  ->  at (B, T, C)
# ---------------------------------------------------------------------------
def gru_kernel(zt_ref, w_ih_ref, w_hh_ref, b_ih_ref, b_hh_ref,
               w_fc_ref, b_fc_ref, at_ref, gx_ref, hseq_ref):
    # zt_ref  : (b_tile, T, 2C)   energy features (avg | max)
    # w_ih_ref: (2C, 3H)  W_ih^T   (gate order r|z|n)
    # w_hh_ref: (H, 3H)   W_hh^T
    # b_ih_ref, b_hh_ref: (1, 3H)
    # w_fc_ref: (H, C)    att_fc.weight^T
    # b_fc_ref: (1, C)
    # at_ref  : (b_tile, T, C)    sigmoid(att_fc(GRU(zt)))
    # gx_ref  : (T, b_tile, 3H)   scratch - input-gate preactivations (time-major)
    # hseq_ref: (T, b_tile, H)    scratch - GRU hidden-state sequence (time-major)
    b_tile, T, _ = zt_ref.shape
    H = w_hh_ref.shape[0]                           # hidden size = 2C

    w_ih = w_ih_ref[...]
    b_ih = b_ih_ref[...]
    # Input contribution to all 3 gates for every time step up front: b_tile
    # 2-D matmuls with M=T (good MXU fill), stored time-major so the serial
    # recurrence indexes the leading dim with a dynamic scalar only.
    for b in range(b_tile):
        gx_ref[:, b, :] = (
            jnp.dot(zt_ref[b], w_ih, preferred_element_type=jnp.float32) + b_ih)

    w_hh = w_hh_ref[...]                            # hoisted out of the loop
    b_hh = b_hh_ref[...]

    def step(t, h):                                 # h: (b_tile, H)
        gx = gx_ref[t]                              # (b_tile, 3H)
        gh = jnp.dot(h, w_hh, preferred_element_type=jnp.float32) + b_hh
        r = jax.nn.sigmoid(gx[:, 0:H] + gh[:, 0:H])
        z = jax.nn.sigmoid(gx[:, H:2 * H] + gh[:, H:2 * H])
        n = jnp.tanh(gx[:, 2 * H:] + r * gh[:, 2 * H:])
        h_new = (1.0 - z) * n + z * h
        hseq_ref[t] = h_new
        return h_new

    # Latency-bound serial recurrence, batched over b_tile and unrolled so the
    # independent gx loads / gh matmul issue of step t+1 overlap step t.
    lax.fori_loop(0, T, step, jnp.zeros((b_tile, H), jnp.float32), unroll=4)

    w_fc = w_fc_ref[...]
    b_fc = b_fc_ref[...]
    # att_fc + sigmoid over the whole hidden sequence (M=T matmul per row).
    for b in range(b_tile):
        at_ref[b] = jax.nn.sigmoid(
            jnp.dot(hseq_ref[:, b, :], w_fc, preferred_element_type=jnp.float32)
            + b_fc)


# ---------------------------------------------------------------------------
# Kernel 3: materialize the .expand(-1,-1,-1,T)  ->  (B, C, T, T)
# ---------------------------------------------------------------------------
def expand_kernel(at_ref, out_ref):
    # at_ref : (1, tt2, C)      attention slab (time-major)
    # out_ref: (1, C, tt2, T)   lane-dense broadcast along the trailing T
    a = at_ref[0]                                   # (tt2, C)
    out_ref[0] = jnp.broadcast_to(a.T[:, :, None], out_ref.shape[1:])


# ---------------------------------------------------------------------------
# Wrapper
# ---------------------------------------------------------------------------
def tra_forward(x, params, *, materialize_expand=True,
                energy_block_bytes=6 * 1024 * 1024,
                expand_block_bytes=4 * 1024 * 1024,
                vmem_limit_bytes=32 * 1024 * 1024):
    """x: (B, C, T, F) f32.
    params = (w_ih, w_hh, b_ih, b_hh, w_fc, b_fc) in PyTorch nn.GRU / nn.Linear
    layout (gate order r|z|n).
    Returns (B, C, T, T) f32, or - with materialize_expand=False - the
    attention map (B, C, T) (PyTorch's .expand is a zero-copy view, so skipping
    the O(T)x HBM writeback is the biggest possible win when the consumer can
    broadcast lazily)."""
    w_ih, w_hh, b_ih, b_hh, w_fc, b_fc = params
    B, C, T, F = x.shape
    H = 2 * C
    assert w_ih.shape == (3 * H, H) and w_hh.shape == (3 * H, H)
    assert w_fc.shape == (C, H)

    f32 = 4

    # ---- Kernel 1: energy features (B, T, 2C) ----------------------------
    tt = _pick_tile(T, C * F * f32, energy_block_bytes)
    n_t = T // tt
    zt = pl.pallas_call(
        energy_kernel,
        out_shape=jax.ShapeDtypeStruct((B, T, 2 * C), jnp.float32),
        grid_spec=pltpu.PrefetchScalarGridSpec(
            num_scalar_prefetch=0,
            grid=(B, n_t),
            in_specs=[pl.BlockSpec((1, C, tt, F), lambda b, ti: (b, 0, ti, 0))],
            out_specs=pl.BlockSpec((1, tt, 2 * C), lambda b, ti: (b, ti, 0)),
        ),
        compiler_params=pltpu.CompilerParams(
            dimension_semantics=("parallel", "parallel"),
            vmem_limit_bytes=_vmem_limit(vmem_limit_bytes,
                                         C * tt * F * f32, tt * 2 * C * f32),
        ),
    )(x)

    # ---- Kernel 2: batched GRU + att_fc + sigmoid -> at (B, T, C) --------
    # Two batch halves ("parallel") only when each half still has enough rows
    # to fill MXU sublanes - keeps both v7x TensorCores busy without shrinking
    # the recurrence batch on 1-TC chips.  Also grow n_b if the per-invocation
    # scratch (gx + hseq = 4H floats per (b, t)) would not fit VMEM.
    n_b = 2 if (B % 2 == 0 and B >= 8) else 1
    while ((B // n_b) * T * 4 * H * f32 > 16 * 1024 * 1024
           and n_b < B and B % (n_b * 2) == 0):
        n_b *= 2
    b_tile = B // n_b

    def _const2d(_):
        return (0, 0)

    weights_bytes = (2 * C * 3 * H + H * 3 * H + H * C + 2 * 3 * H + C) * f32
    at = pl.pallas_call(
        gru_kernel,
        out_shape=jax.ShapeDtypeStruct((B, T, C), jnp.float32),
        grid_spec=pltpu.PrefetchScalarGridSpec(
            num_scalar_prefetch=0,
            grid=(n_b,),
            in_specs=[
                pl.BlockSpec((b_tile, T, 2 * C), lambda bi: (bi, 0, 0)),
                # Constant-index weights/biases: single resident VMEM buffer.
                pl.BlockSpec((2 * C, 3 * H), _const2d, pipeline_mode=pl.Buffered(1)),
                pl.BlockSpec((H, 3 * H), _const2d, pipeline_mode=pl.Buffered(1)),
                pl.BlockSpec((1, 3 * H), _const2d, pipeline_mode=pl.Buffered(1)),
                pl.BlockSpec((1, 3 * H), _const2d, pipeline_mode=pl.Buffered(1)),
                pl.BlockSpec((H, C), _const2d, pipeline_mode=pl.Buffered(1)),
                pl.BlockSpec((1, C), _const2d, pipeline_mode=pl.Buffered(1)),
            ],
            out_specs=pl.BlockSpec((b_tile, T, C), lambda bi: (bi, 0, 0)),
            scratch_shapes=[
                pltpu.VMEM((T, b_tile, 3 * H), jnp.float32),   # gate preacts
                pltpu.VMEM((T, b_tile, H), jnp.float32),       # hidden states
            ],
        ),
        compiler_params=pltpu.CompilerParams(
            dimension_semantics=("parallel",),
            vmem_limit_bytes=_vmem_limit(
                vmem_limit_bytes,
                b_tile * T * 2 * C * f32,          # zt block
                b_tile * T * C * f32,              # at block
                T * b_tile * 4 * H * f32,          # scratches (3H + H)
                weights_bytes),
        ),
    )(zt, w_ih.T, w_hh.T, b_ih.reshape(1, 3 * H), b_hh.reshape(1, 3 * H),
      w_fc.T, b_fc.reshape(1, C))
    # NOTE: in-kernel dots use the MXU default f32 precision; for very long
    # sequences request lax.Precision.HIGHEST if bit-tight accuracy is needed.

    if not materialize_expand:
        return jnp.transpose(at, (0, 2, 1))        # (B, C, T)

    # ---- Kernel 3: broadcast writeback (B, C, T, T), lane-dense last dim ---
    tt2 = _pick_tile(T, C * T * f32, expand_block_bytes)
    n_t2 = T // tt2
    out = pl.pallas_call(
        expand_kernel,
        out_shape=jax.ShapeDtypeStruct((B, C, T, T), jnp.float32),
        grid_spec=pltpu.PrefetchScalarGridSpec(
            num_scalar_prefetch=0,
            grid=(B, n_t2),
            in_specs=[pl.BlockSpec((1, tt2, C), lambda b, ti: (b, ti, 0))],
            out_specs=pl.BlockSpec((1, C, tt2, T), lambda b, ti: (b, 0, ti, 0)),
        ),
        compiler_params=pltpu.CompilerParams(
            dimension_semantics=("parallel", "parallel"),
            vmem_limit_bytes=_vmem_limit(vmem_limit_bytes,
                                         tt2 * C * f32, C * tt2 * T * f32),
        ),
    )(at)
    return out


# ---------------------------------------------------------------------------
# Pure-JAX reference (mirrors the PyTorch module exactly)
# ---------------------------------------------------------------------------
def tra_reference(x, params):
    w_ih, w_hh, b_ih, b_hh, w_fc, b_fc = params
    B, C, T, F = x.shape
    H = 2 * C
    hp = jax.lax.Precision.HIGHEST

    x2 = x * x
    zt = jnp.concatenate([jnp.mean(x2, -1), jnp.max(x2, -1)], axis=1)  # (B,2C,T)
    zt = jnp.transpose(zt, (0, 2, 1))                                  # (B,T,2C)

    def cell(h, x_t):                                                  # x_t: (B,2C)
        gx = jnp.dot(x_t, w_ih.T, precision=hp) + b_ih
        gh = jnp.dot(h, w_hh.T, precision=hp) + b_hh
        r = jax.nn.sigmoid(gx[:, :H] + gh[:, :H])
        z = jax.nn.sigmoid(gx[:, H:2 * H] + gh[:, H:2 * H])
        n = jnp.tanh(gx[:, 2 * H:] + r * gh[:, 2 * H:])
        h_new = (1.0 - z) * n + z * h
        return h_new, h_new

    h0 = jnp.zeros((B, H), jnp.float32)
    _, hs = lax.scan(cell, h0, jnp.transpose(zt, (1, 0, 2)))           # (T,B,H)
    at = jnp.transpose(hs, (1, 0, 2))                                  # (B,T,H)
    at = jax.nn.sigmoid(jnp.dot(at, w_fc.T, precision=hp) + b_fc)      # (B,T,C)
    at = jnp.transpose(at, (0, 2, 1))                                  # (B,C,T)
    return jnp.broadcast_to(at[..., None], (B, C, T, T))


if __name__ == "__main__":
    key = jax.random.PRNGKey(0)
    B, C, T, F = 2, 4, 16, 16          # batch, channels, time frames, freq bins
    H = 2 * C
    bound = 1.0 / math.sqrt(H)

    ks = jax.random.split(key, 7)
    x = jax.random.normal(ks[0], (B, C, T, F), dtype=jnp.float32)
    w_ih = jax.random.uniform(ks[1], (3 * H, H), jnp.float32, -bound, bound)
    w_hh = jax.random.uniform(ks[2], (3 * H, H), jnp.float32, -bound, bound)
    b_ih = jax.random.uniform(ks[3], (3 * H,), jnp.float32, -bound, bound)
    b_hh = jax.random.uniform(ks[4], (3 * H,), jnp.float32, -bound, bound)
    w_fc = jax.random.uniform(ks[5], (C, H), jnp.float32, -bound, bound)
    b_fc = jax.random.uniform(ks[6], (C,), jnp.float32, -bound, bound)
    params = (w_ih, w_hh, b_ih, b_hh, w_fc, b_fc)

    out = tra_forward(x, params)
    out = jax.block_until_ready(out)

    ref = tra_reference(x, params)
    assert out.shape == (B, C, T, T), out.shape
    max_err = float(jnp.max(jnp.abs(out - ref)))
    assert max_err < 2e-4, max_err
    print("KERNEL_OK")
</pallas_src>

<mosaic_0001>
module attributes {stable_mosaic.version = 11 : i64} {
  func.func @energy_kernel(%arg0: i32, %arg1: i32, %arg2: memref<1x4x16x16xf32, #tpu.memory_space<vmem>>, %arg3: memref<1x16x8xf32, #tpu.memory_space<vmem>>) attributes {dimension_semantics = [#tpu.dimension_semantics<parallel>, #tpu.dimension_semantics<parallel>], iteration_bounds = array<i64: 2, 1>, scalar_prefetch = 0 : i64, scratch_operands = 0 : i64, tpu.core_type = #tpu.core_type<tc>, window_params = [{transform_indices = @transform_0, window_bounds = array<i64: 1, 4, 16, 16>}, {transform_indices = @transform_1, window_bounds = array<i64: 1, 16, 8>}]} {
    %c0 = arith.constant 0 : index
    %c0_0 = arith.constant 0 : index
    %c0_1 = arith.constant 0 : index
    %c0_2 = arith.constant 0 : index
    %0 = vector.load %arg2[%c0, %c0_0, %c0_1, %c0_2] : memref<1x4x16x16xf32, #tpu.memory_space<vmem>>, vector<1x4x16x16xf32>
    %1 = vector.shape_cast %0 : vector<1x4x16x16xf32> to vector<4x16x16xf32>
    %2 = arith.mulf %1, %1 : vector<4x16x16xf32>
    %cst = arith.constant dense<0.000000e+00> : vector<4x16xf32>
    %3 = vector.multi_reduction <add>, %2, %cst [2] : vector<4x16x16xf32> to vector<4x16xf32>
    %cst_3 = arith.constant 1.600000e+01 : f32
    %4 = vector.broadcast %cst_3 : f32 to vector<4x16xf32>
    %5 = arith.divf %3, %4 : vector<4x16xf32>
    %6 = tpu.transpose %5, [1, 0] : vector<4x16xf32> -> vector<16x4xf32>
    %c0_4 = arith.constant 0 : index
    %c0_5 = arith.constant 0 : index
    %c0_6 = arith.constant 0 : index
    %7 = vector.load %arg3[%c0_4, %c0_5, %c0_6] : memref<1x16x8xf32, #tpu.memory_space<vmem>>, vector<1x16x4xf32>
    %8 = vector.shape_cast %7 : vector<1x16x4xf32> to vector<16x4xf32>
    %9 = vector.shape_cast %6 : vector<16x4xf32> to vector<1x16x4xf32>
    tpu.vector_store %arg3[%c0_4, %c0_5, %c0_6], %9 {strides = array<i32>} : memref<1x16x8xf32, #tpu.memory_space<vmem>>, vector<1x16x4xf32>,
    %cst_7 = arith.constant dense<0xFF800000> : vector<4x16xf32>
    %10 = vector.multi_reduction <maximumf>, %2, %cst_7 [2] : vector<4x16x16xf32> to vector<4x16xf32>
    %11 = tpu.transpose %10, [1, 0] : vector<4x16xf32> -> vector<16x4xf32>
    %c0_8 = arith.constant 0 : index
    %c0_9 = arith.constant 0 : index
    %c4 = arith.constant 4 : index
    %12 = vector.load %arg3[%c0_8, %c0_9, %c4] : memref<1x16x8xf32, #tpu.memory_space<vmem>>, vector<1x16x4xf32>
    %13 = vector.shape_cast %12 : vector<1x16x4xf32> to vector<16x4xf32>
    %14 = vector.shape_cast %11 : vector<16x4xf32> to vector<1x16x4xf32>
    tpu.vector_store %arg3[%c0_8, %c0_9, %c4], %14 {strides = array<i32>} : memref<1x16x8xf32, #tpu.memory_space<vmem>>, vector<1x16x4xf32>,
    return
  }
  func.func @transform_0(%arg0: i32, %arg1: i32) -> (i32, i32, i32, i32) {
    %c0_i32 = arith.constant 0 : i32
    %c0_i32_0 = arith.constant 0 : i32
    %c0_i32_1 = arith.constant 0 : i32
    return %arg0, %c0_i32, %arg1, %c0_i32_0 : i32, i32, i32, i32
  }
  func.func @transform_1(%arg0: i32, %arg1: i32) -> (i32, i32, i32) {
    %c0_i32 = arith.constant 0 : i32
    %c0_i32_0 = arith.constant 0 : i32
    return %arg0, %arg1, %c0_i32 : i32, i32, i32
  }
}

</mosaic_0001>

<llo_original>
// kernel: tpu_custom_call.1
$region0: #{tpu_custom_call.1}
  #allocation0 [shape = 'u32[]', space=smem, size = 0x4, offset = 0x4, fixed_abs, tag = 'smem constant byte address 0x4 - core index']
  #allocation1 [shape = 'u32[72,128]{1,0:T(1,128)}', space=vmem, size = 0x9000, scoped, tag = 'internal scratch']
  %s0 = inlined_call_operand.hbm [shape: f32[2,4,16,16], index: 0, kind: input, shape index: {}]
  %s1 = inlined_call_operand.vmem [shape: f32[2,16,8], index: 1, kind: output, shape index: {}]
  %s2 = sld [smem:[#allocation0]]
  $region41: #{tpu_custom_call.1} parent=0
    _
  %s4 = ssub.s32 1, %s2
  %s5 = scalar_select 0, %s4, %s2
  $region1: #{tpu_custom_call.1} parent=0
    #allocation2 [shape = 'u8[65536]{0}', space=vmem, size = 0x10000, scoped, tag = 'input window, operand 0']
    #allocation3 [shape = 's32[2]{0}', space=sflag, size = 0x8, scoped, tag = 'scoped memory for tpu_custom_call.1']
    %6 = vsyncpa [#allocation3], 0
    %s7 = scalar_lea.sflag [#allocation3], 1
    %8 = vsyncpa %s7, 0
    loop: start=0, step=1, limit=4
    $region2: #{tpu_custom_call.1} parent=1 // loop_pre_header
      _
    $region3: #{tpu_custom_call.1} parent=1 // loop_header
      %s10 = sphi 0, %s14
      %p11 = scmp.ge.s32.totalorder %s10, 4
      %s17 = sphi 0, %s29
      %s18 = sphi 0, %s25
      %s19 = sphi 0, %s17
      %s20 = sphi 0, %s18
      %s21 = sphi 0, %s19
      %s22 = sphi 0, %s20
      %s34 = sphi 0, %s36
      %s37 = sphi 0, %s34
      %s38 = sphi 0, %s37
      %s54 = sphi 0, %s38
      %s62 = sphi 0, %s64
      %s65 = sphi 0, %s62
      %s66 = sphi 0, %s65
      %s82 = sphi 0, %s66
    $region4: #{tpu_custom_call.1} parent=1 // loop_header_branch
      %13 = sbr.rel (%p11) target = $region8
    $region5: #{tpu_custom_call.1} parent=1 // loop_body
      %s15 = ssub.s32 %s10, 1
      %s16 = ssub.s32 %s10, 2
      %s23 = sadd.s32 1, %s18
      %p24 = scmp.ge.s32.totalorder %s23, 1
      %s25 = scalar_select %p24, 0, %s23
      %s26 = sadd.s32 1, %s17
      %s27 = scalar_select %p24, %s26, %s17
      %p28 = scmp.ge.s32.totalorder %s27, 2
      %s29 = scalar_select %p28, 0, %s27
      %s30 = ssub.s32 %s17, %s29
      %s31 = ssub.s32 %s18, %s25
      %s32 = sor.u32 %s30, %s31
      %p33 = scmp.eq.s32.totalorder %s32, 0
      %s35 = sadd.s32 %s34, 1
      %s36 = scalar_select %p33, %s34, %s35
      %p39 = pneg %p33
      %p40 = scmp.eq.s32.totalorder %s10, 1
      %p41 = por %p39, %p40
      %p42 = scmp.ne.s32.totalorder %s34, %s37
      %p43 = scmp.eq.s32.totalorder %s10, 0
      %p44 = por %p42, %p43
      %p45 = scmp.ne.s32.totalorder %s34, %s37
      %p46 = scmp.eq.s32.totalorder %s15, 1
      %p47 = por %p45, %p46
      %p48 = scmp.ne.s32.totalorder %s37, %s38
      %p49 = scmp.eq.s32.totalorder %s15, 0
      %p50 = por %p48, %p49
      %p51 = scmp.ne.s32.totalorder %s37, %s38
      %p52 = scmp.eq.s32.totalorder %s16, 1
      %p53 = por %p51, %p52
      %p55 = scmp.ne.s32.totalorder %s38, %s54
      %p56 = scmp.eq.s32.totalorder %s16, 0
      %p57 = por %p55, %p56
      %s58 = ssub.s32 %s17, %s29
      %s59 = ssub.s32 %s18, %s25
      %s60 = sor.u32 %s58, %s59
      %p61 = scmp.eq.s32.totalorder %s60, 0
      %s63 = sadd.s32 %s62, 1
      %s64 = scalar_select %p61, %s62, %s63
      %p67 = pneg %p61
      %p68 = scmp.eq.s32.totalorder %s10, 1
      %p69 = por %p67, %p68
      %p70 = scmp.ne.s32.totalorder %s62, %s65
      %p71 = scmp.eq.s32.totalorder %s10, 0
      %p72 = por %p70, %p71
      %p73 = scmp.ne.s32.totalorder %s62, %s65
      %p74 = scmp.eq.s32.totalorder %s15, 1
      %p75 = por %p73, %p74
      %p76 = scmp.ne.s32.totalorder %s65, %s66
      %p77 = scmp.eq.s32.totalorder %s15, 0
      %p78 = por %p76, %p77
      %p79 = scmp.ne.s32.totalorder %s65, %s66
      %p80 = scmp.eq.s32.totalorder %s16, 1
      %p81 = por %p79, %p80
      %p83 = scmp.ne.s32.totalorder %s66, %s82
      %p84 = scmp.eq.s32.totalorder %s16, 0
      %p85 = por %p83, %p84
      %p86 = scmp.le.s32.totalorder 1, %s10
      %p87 = scmp.lt.s32.totalorder %s10, 3
      %p88 = pnand %p86, %p87
      %p89 = pneg %p88
      // Predicated region
      $region9: #{tpu_custom_call.1} parent=5 // pred_check
        _
      $region10: #{tpu_custom_call.1} parent=5 // pred_check_branch
        %91 = sbr.rel (%p88) target = $region12
      $region11: #{tpu_custom_call.1} parent=5 // pred_region
        %s92 = ssub.s32 %s10, 1
      $region12: #{tpu_custom_call.1} parent=5 // pred_fallthru
        _
      %p93 = scmp.lt.s32.totalorder %s10, 2
      // Predicated region
      $region13: #{tpu_custom_call.1} parent=5 // pred_check
        %p94 = pneg %p93
      $region14: #{tpu_custom_call.1} parent=5 // pred_check_branch
        %96 = sbr.rel (%p94) target = $region16
      $region15: #{tpu_custom_call.1} parent=5 // pred_region
        // Predicated region
        $region17: #{tpu_custom_call.1} parent=15 // pred_check
          %p97 = pneg %p44
        $region18: #{tpu_custom_call.1} parent=15 // pred_check_branch
          %99 = sbr.rel (%p97) target = $region20
        $region19: #{tpu_custom_call.1} parent=15 // pred_region
          %s100 = sand.u32 %s34, 1
          %s101 = scalar_lea.sflag [#allocation3], %s100
          %s102 = sand.u32 %s34, 1
          %s103 = smul.addr %s102, 64
          %s104 = scalar_lea.vmem [#allocation2], %s103
          %s105 = smul.u32 2, %s18
          %107 = vsyncadd %s101, 0
          %s108 = smul.addr %s17, 8
          %s109 = sadd.s32 %s105, %s108
          %s110 = smul.addr %s109, 8
          %s111 = scalar_lea.hbm %s0, %s110
          %s112 = sshll.u32 %s111, 4
          %s113 = int_to_ptr.hbm [resolvable:$true] %s112
          %s114 = sshll.u32 %s104, 4
          %s115 = int_to_ptr.vmem [resolvable:$true] %s114
          %120 = dma.hbm_to_vmem [thread:$0]  %s113, 1024, %s115, %s101, 128, 128, 8
        $region20: #{tpu_custom_call.1} parent=15 // pred_fallthru
          _
      $region16: #{tpu_custom_call.1} parent=5 // pred_fallthru
        _
      %p121 = scmp.le.s32.totalorder 1, %s10
      %p122 = scmp.lt.s32.totalorder %s10, 3
      %p123 = pnand %p121, %p122
      %p124 = pneg %p123
      // Predicated region
      $region21: #{tpu_custom_call.1} parent=5 // pred_check
        _
      $region22: #{tpu_custom_call.1} parent=5 // pred_check_branch
        %126 = sbr.rel (%p123) target = $region24
      $region23: #{tpu_custom_call.1} parent=5 // pred_region
        %s127 = ssub.s32 %s10, 1
        %s128 = sand.u32 %s37, 1
        %s129 = scalar_lea.sflag [#allocation3], %s128
        %s130 = sand.u32 %s37, 1
        %s131 = smul.addr %s130, 64
        %s132 = scalar_lea.vmem [#allocation2], %s131
        // Predicated region
        $region25: #{tpu_custom_call.1} parent=23 // pred_check
          %p133 = pneg %p50
        $region26: #{tpu_custom_call.1} parent=23 // pred_check_branch
          %135 = sbr.rel (%p133) target = $region28
        $region27: #{tpu_custom_call.1} parent=23 // pred_region
          %137 = dma.done %s129, 1024
        $region28: #{tpu_custom_call.1} parent=23 // pred_fallthru
          _
        %s138 = sand.u32 %s37, 1
        %s139 = scalar_lea.sflag [#allocation3], %s138
        %s140 = sand.u32 %s37, 1
        %s141 = smul.addr %s140, 64
        %s142 = scalar_lea.vmem [#allocation2], %s141
        %p143 = pneg %p50
        %p144 = pneg %p47
        %p145 = pneg %p78
        %p146 = pneg %p75
        %s147 = smul.u32 2, %s20
        %p148 = scmp.lt.s32.totalorder %s19, 1
        %s149 = scalar_select %p148, %s19, 1
        %p150 = scmp.lt.s32.totalorder %s147, 1
        %s151 = scalar_select %p150, %s147, 1
        %s152 = smul.addr %s149, 2
        %s153 = sadd.s32 %s151, %s152
        %s154 = smul.addr %s153, 8
        %s155 = scalar_lea.vmem %s1, %s154
        %s156 = smul.u32 2, %s20
        %s157 = smul.u32 2, %s20
        %p158 = scmp.lt.s32.totalorder %s19, 1
        %s159 = scalar_select %p158, %s19, 1
        %p160 = scmp.lt.s32.totalorder %s157, 1
        %s161 = scalar_select %p160, %s157, 1
        %s162 = smul.addr %s159, 2
        %s163 = sadd.s32 %s161, %s162
        %s164 = smul.addr %s163, 8
        %s165 = scalar_lea.vmem %s1, %s164
        %s166 = smul.u32 2, %s20
        %v167 = vld [vmem:[%s132] sm:$0xff]
        %v168 = vld [vmem:[%s132 + $0x8] sm:$0xff]
        %v169 = vld [vmem:[%s132 + $0x10] sm:$0xff]
        %v170 = vld [vmem:[%s132 + $0x18] sm:$0xff]
        %v171 = vld [vmem:[%s132 + $0x20] sm:$0xff]
        %v172 = vld [vmem:[%s132 + $0x28] sm:$0xff]
        %v173 = vld [vmem:[%s132 + $0x30] sm:$0xff]
        %v174 = vld [vmem:[%s132 + $0x38] sm:$0xff]
        %v175 = vmul.f32 %v167, %v167
        %v176 = vmul.f32 %v168, %v168
        %v177 = vmul.f32 %v169, %v169
        %v178 = vmul.f32 %v170, %v170
        %v179 = vmul.f32 %v171, %v171
        %v180 = vmul.f32 %v172, %v172
        %v181 = vmul.f32 %v173, %v173
        %v182 = vmul.f32 %v174, %v174
        %vm183 = vcmask 130048
        %v184 = vsel %vm183, %v175, 0.0
        %185 = vadd.xlane.f32.xlu0 %v184
        %v186 = vpop.xlane.xlu0 %185
        %v187 = vsel %vm183, %v176, 0.0
        %188 = vadd.xlane.f32.xlu0 %v187
        %v189 = vpop.xlane.xlu0 %188
        %v190 = vsel %vm183, %v177, 0.0
        %191 = vadd.xlane.f32.xlu0 %v190
        %v192 = vpop.xlane.xlu0 %191
        %v193 = vsel %vm183, %v178, 0.0
        %194 = vadd.xlane.f32.xlu0 %v193
        %v195 = vpop.xlane.xlu0 %194
        %v196 = vsel %vm183, %v179, 0.0
        %197 = vadd.xlane.f32.xlu0 %v196
        %v198 = vpop.xlane.xlu0 %197
        %v199 = vsel %vm183, %v180, 0.0
        %200 = vadd.xlane.f32.xlu0 %v199
        %v201 = vpop.xlane.xlu0 %200
        %v202 = vsel %vm183, %v181, 0.0
        %203 = vadd.xlane.f32.xlu0 %v202
        %v204 = vpop.xlane.xlu0 %203
        %v205 = vsel %vm183, %v182, 0.0
        %206 = vadd.xlane.f32.xlu0 %v205
        %v207 = vpop.xlane.xlu0 %206
        %v208 = vrcp.pop 16.0
        %v209 = vmul.f32 16.0, %v208
        %v210 = vsub.f32 1.0, %v209
        %v211 = vmul.f32 %v208, %v210
        %v212 = vadd.f32 %v208, %v211
        %vm213 = vweird.f32 %v208
        %v214 = vsel %vm213, %v208, %v212
        %v215 = vmul.f32 %v186, %v214
        %v216 = vmul.f32 %v189, %v214
        %v217 = vmul.f32 %v192, %v214
        %v218 = vmul.f32 %v195, %v214
        %v219 = vmul.f32 %v198, %v214
        %v220 = vmul.f32 %v201, %v214
        %v221 = vmul.f32 %v204, %v214
        %v222 = vmul.f32 %v207, %v214
        %v231 = vlaneseq
        %v232 = vand.u32 %v231, 127
        %v233 = vperm.slane %v215, %v232
        %v234 = vadd.s32 %v232, 4294967288
        %v235 = vperm.slane %v216, %v234
        %vm236 = vcmask 130112
        %v237 = vsel %vm236, %v235, %v233
        %v238 = vperm.slane %v217, %v232
        %v239 = vperm.slane %v218, %v234
        %v240 = vsel %vm236, %v239, %v238
        %v241 = vperm.slane %v219, %v232
        %v242 = vperm.slane %v220, %v234
        %v243 = vsel %vm236, %v242, %v241
        %v244 = vperm.slane %v221, %v232
        %v245 = vperm.slane %v222, %v234
        %v246 = vsel %vm236, %v245, %v244
        %vm247 = vcmask 1041409
        %v248 = vsel %vm247, %v240, %v237
        %vm249 = vcmask 1042434
        %v250 = vsel %vm249, %v243, %v248
        %vm251 = vcmask 1043459
        %v252 = vsel %vm251, %v246, %v250
        %254 = vxpose.xlu0.b32.start [1/16] %v252, 128
        %255 = vxpose.xlu0.b32.cont [2/16] 0.0, 128
        %256 = vxpose.xlu0.b32.cont [3/16] 0.0, 128
        %257 = vxpose.xlu0.b32.cont [4/16] 0.0, 128
        %258 = vxpose.xlu0.b32.cont [5/16] 0.0, 128
        %259 = vxpose.xlu0.b32.cont [6/16] 0.0, 128
        %260 = vxpose.xlu0.b32.cont [7/16] 0.0, 128
        %261 = vxpose.xlu0.b32.cont [8/16] 0.0, 128
        %262 = vxpose.xlu0.b32.cont [9/16] 0.0, 128
        %263 = vxpose.xlu0.b32.cont [10/16] 0.0, 128
        %264 = vxpose.xlu0.b32.cont [11/16] 0.0, 128
        %265 = vxpose.xlu0.b32.cont [12/16] 0.0, 128
        %266 = vxpose.xlu0.b32.cont [13/16] 0.0, 128
        %267 = vxpose.xlu0.b32.cont [14/16] 0.0, 128
        %268 = vxpose.xlu0.b32.cont [15/16] 0.0, 128
        %269 = vxpose.xlu0.b32.end [16/16] 0.0, 128
        %v270 = vpop.trf.xlu0
        %v271 = vpop.trf.xlu0
        %v272 = vpop.trf.xlu0
        %v273 = vpop.trf.xlu0
        %v274 = vpop.trf.xlu0
        %v275 = vpop.trf.xlu0
        %v276 = vpop.trf.xlu0
        %v277 = vpop.trf.xlu0
        %v278 = vpop.trf.xlu0
        %v279 = vpop.trf.xlu0
        %v280 = vpop.trf.xlu0
        %v281 = vpop.trf.xlu0
        %v282 = vpop.trf.xlu0
        %v283 = vpop.trf.xlu0
        %v284 = vpop.trf.xlu0
        %v285 = vpop.trf.xlu0
        %vm286 = vcmask 31744
        %287 = vst.msk [vmem:[%s165] sm:$0xff] %vm286, %v270
        %288 = vst.msk [vmem:[%s165 + $0x8] sm:$0xff] %vm286, %v271
        %v289 = vsel %vm183, %v175, -inf
        %290 = vmax.xlane.f32.xlu0 %v289
        %v291 = vpop.xlane.xlu0 %290
        %v292 = vsel %vm183, %v176, -inf
        %293 = vmax.xlane.f32.xlu0 %v292
        %v294 = vpop.xlane.xlu0 %293
        %v295 = vsel %vm183, %v177, -inf
        %296 = vmax.xlane.f32.xlu0 %v295
        %v297 = vpop.xlane.xlu0 %296
        %v298 = vsel %vm183, %v178, -inf
        %299 = vmax.xlane.f32.xlu0 %v298
        %v300 = vpop.xlane.xlu0 %299
        %v301 = vsel %vm183, %v179, -inf
        %302 = vmax.xlane.f32.xlu0 %v301
        %v303 = vpop.xlane.xlu0 %302
        %v304 = vsel %vm183, %v180, -inf
        %305 = vmax.xlane.f32.xlu0 %v304
        %v306 = vpop.xlane.xlu0 %305
        %v307 = vsel %vm183, %v181, -inf
        %308 = vmax.xlane.f32.xlu0 %v307
        %v309 = vpop.xlane.xlu0 %308
        %v310 = vsel %vm183, %v182, -inf
        %311 = vmax.xlane.f32.xlu0 %v310
        %v312 = vpop.xlane.xlu0 %311
        %v321 = vperm.slane %v291, %v232
        %v322 = vperm.slane %v294, %v234
        %v323 = vsel %vm236, %v322, %v321
        %v324 = vperm.slane %v297, %v232
        %v325 = vperm.slane %v300, %v234
        %v326 = vsel %vm236, %v325, %v324
        %v327 = vperm.slane %v303, %v232
        %v328 = vperm.slane %v306, %v234
        %v329 = vsel %vm236, %v328, %v327
        %v330 = vperm.slane %v309, %v232
        %v331 = vperm.slane %v312, %v234
        %v332 = vsel %vm236, %v331, %v330
        %v333 = vsel %vm247, %v326, %v323
        %v334 = vsel %vm249, %v329, %v333
        %v335 = vsel %vm251, %v332, %v334
        %337 = vxpose.xlu0.b32.start [1/16] %v335, 128
        %338 = vxpose.xlu0.b32.cont [2/16] 0.0, 128
        %339 = vxpose.xlu0.b32.cont [3/16] 0.0, 128
        %340 = vxpose.xlu0.b32.cont [4/16] 0.0, 128
        %341 = vxpose.xlu0.b32.cont [5/16] 0.0, 128
        %342 = vxpose.xlu0.b32.cont [6/16] 0.0, 128
        %343 = vxpose.xlu0.b32.cont [7/16] 0.0, 128
        %344 = vxpose.xlu0.b32.cont [8/16] 0.0, 128
        %345 = vxpose.xlu0.b32.cont [9/16] 0.0, 128
        %346 = vxpose.xlu0.b32.cont [10/16] 0.0, 128
        %347 = vxpose.xlu0.b32.cont [11/16] 0.0, 128
        %348 = vxpose.xlu0.b32.cont [12/16] 0.0, 128
        %349 = vxpose.xlu0.b32.cont [13/16] 0.0, 128
        %350 = vxpose.xlu0.b32.cont [14/16] 0.0, 128
        %351 = vxpose.xlu0.b32.cont [15/16] 0.0, 128
        %352 = vxpose.xlu0.b32.end [16/16] 0.0, 128
        %v353 = vpop.trf.xlu0
        %v354 = vpop.trf.xlu0
        %v355 = vpop.trf.xlu0
        %v356 = vpop.trf.xlu0
        %v357 = vpop.trf.xlu0
        %v358 = vpop.trf.xlu0
        %v359 = vpop.trf.xlu0
        %v360 = vpop.trf.xlu0
        %v361 = vpop.trf.xlu0
        %v362 = vpop.trf.xlu0
        %v363 = vpop.trf.xlu0
        %v364 = vpop.trf.xlu0
        %v365 = vpop.trf.xlu0
        %v366 = vpop.trf.xlu0
        %v367 = vpop.trf.xlu0
        %v368 = vpop.trf.xlu0
        %371 = vrot.lane.b32.xlu0 %v353, 4
        %v372 = vpop.permute.xlu0 %371
        %373 = vrot.lane.b32.xlu0 %v354, 4
        %v374 = vpop.permute.xlu0 %373
        %vm377 = vcmask 64544
        %378 = vst.msk [vmem:[%s165] sm:$0xff] %vm377, %v372
        %379 = vst.msk [vmem:[%s165 + $0x8] sm:$0xff] %vm377, %v374
        %s380 = smul.u32 2, %s20
        %p381 = scmp.lt.s32.totalorder %s19, 1
        %s382 = scalar_select %p381, %s19, 1
        %p383 = scmp.lt.s32.totalorder %s380, 1
        %s384 = scalar_select %p383, %s380, 1
        %s385 = smul.addr %s382, 2
        %s386 = sadd.s32 %s384, %s385
        %s387 = smul.addr %s386, 8
        %s388 = scalar_lea.vmem %s1, %s387
        // Predicated region
        $region29: #{tpu_custom_call.1} parent=23 // pred_check
          %p389 = pneg %p75
        $region30: #{tpu_custom_call.1} parent=23 // pred_check_branch
          %391 = sbr.rel (%p389) target = $region32
        $region31: #{tpu_custom_call.1} parent=23 // pred_region
          %s392 = smul.u32 2, %s20
        $region32: #{tpu_custom_call.1} parent=23 // pred_fallthru
          _
      $region24: #{tpu_custom_call.1} parent=5 // pred_fallthru
        _
      %p393 = scmp.le.s32.totalorder 2, %s10
      // Predicated region
      $region33: #{tpu_custom_call.1} parent=5 // pred_check
        %p394 = pneg %p393
      $region34: #{tpu_custom_call.1} parent=5 // pred_check_branch
        %396 = sbr.rel (%p394) target = $region36
      $region35: #{tpu_custom_call.1} parent=5 // pred_region
        %s397 = ssub.s32 %s10, 2
        // Predicated region
        $region37: #{tpu_custom_call.1} parent=35 // pred_check
          %p398 = pneg %p81
        $region38: #{tpu_custom_call.1} parent=35 // pred_check_branch
          %400 = sbr.rel (%p398) target = $region40
        $region39: #{tpu_custom_call.1} parent=35 // pred_region
          %s401 = smul.u32 2, %s22
          %p402 = scmp.lt.s32.totalorder %s21, 1
          %s403 = scalar_select %p402, %s21, 1
          %p404 = scmp.lt.s32.totalorder %s401, 1
          %s405 = scalar_select %p404, %s401, 1
          %s406 = smul.addr %s403, 2
          %s407 = sadd.s32 %s405, %s406
          %s408 = smul.addr %s407, 8
          %s409 = scalar_lea.vmem %s1, %s408
        $region40: #{tpu_custom_call.1} parent=35 // pred_fallthru
          _
      $region36: #{tpu_custom_call.1} parent=5 // pred_fallthru
        _
    $region6: #{tpu_custom_call.1} parent=1 // loop_footer
      %s14 = sadd.s32 1, %s10
    $region7: #{tpu_custom_call.1} parent=1 // loop_footer_branch
      %9 = sbr.rel target = $region3
    $region8: #{tpu_custom_call.1} parent=1 // loop_exit
      _
    %410 = vsyncpa [#allocation3], 1
    %s411 = scalar_lea.sflag [#allocation3], 1
    %412 = vsyncpa %s411, 1

</llo_original>
